<compile_context>
chip_gen: v6e
topology: v6e:2x2x1
jax: 0.10.0
libtpu: 0.0.40
codegen_flags: <defaults>
</compile_context>

<pallas_src>
import jax
import jax.numpy as jnp
from jax.experimental import pallas as pl
from jax.experimental.pallas import tpu as pltpu


STATE_DIM = 5       # as in the module
ACTION_DIM = 20     # num_assets = 5 -> 5*4 ordered (i, j) pairs
HIDDEN1 = 128
HIDDEN2 = 128

A_PAD = 128         # action_dim padded to the 128-lane width (lane-dense store)


def _round_up(n, m):
    return ((n + m - 1) // m) * m


def dqn_kernel(x_ref, w1_ref, b1_ref, w2_ref, b2_ref, w3_ref, b3_ref, o_ref):
    # fc1 + ReLU: tiny K=5 contraction, kept in f32 (FLOPs negligible, avoids
    # any wrapper-side cast of x).
    h1 = jnp.dot(x_ref[...], w1_ref[...], preferred_element_type=jnp.float32)
    h1 = jnp.maximum(h1 + b1_ref[...], 0.0)
    # fc2 + ReLU: the fat 128x128 matmul -> bf16 MXU inputs, f32 accumulation.
    h2 = jnp.dot(h1.astype(jnp.bfloat16), w2_ref[...],
                 preferred_element_type=jnp.float32)
    h2 = jnp.maximum(h2 + b2_ref[...], 0.0)
    # fc3: f32 weights (Q-value / argmax fidelity), lane-padded to 128 cols.
    q = jnp.dot(h2, w3_ref[...], preferred_element_type=jnp.float32)
    o_ref[...] = q + b3_ref[...]


def init_params(key, state_dim, hidden1, hidden2, action_dim):
    """PyTorch nn.Linear-style init; weights stored (in, out) so fwd is x @ W + b."""
    def linear(key, fan_in, fan_out):
        kw, kb = jax.random.split(key)
        bound = 1.0 / jnp.sqrt(jnp.float32(fan_in))
        w = jax.random.uniform(kw, (fan_in, fan_out), jnp.float32, -bound, bound)
        b = jax.random.uniform(kb, (1, fan_out), jnp.float32, -bound, bound)
        return w, b

    k1, k2, k3 = jax.random.split(key, 3)
    w1, b1 = linear(k1, state_dim, hidden1)
    w2, b2 = linear(k2, hidden1, hidden2)
    w3, b3 = linear(k3, hidden2, action_dim)
    return (w1, b1, w2, b2, w3, b3)


def prepare_params(params):
    """One-time param prep: fc2 -> bf16, fc3 padded to 128 output lanes (f32)."""
    w1, b1, w2, b2, w3, b3 = params
    action_dim = w3.shape[1]
    w3p = jnp.zeros((w3.shape[0], A_PAD), jnp.float32).at[:, :action_dim].set(w3)
    b3p = jnp.zeros((1, A_PAD), jnp.float32).at[:, :action_dim].set(b3)
    return (w1, b1, w2.astype(jnp.bfloat16), b2, w3p, b3p)


def dqn_forward(x, kernel_params, action_dim=ACTION_DIM, num_tiles=None,
                slice_output=True):
    """x: (B, state_dim) f32 -> (B, action_dim) f32 Q-values.

    slice_output=False returns the padded (B, 128) block (extra columns are
    exact zeros) so a consumer can fuse the action mask/argmax itself.
    """
    w1, b1, w2, b2, w3, b3 = kernel_params
    B, S = x.shape
    H1 = w1.shape[1]
    H2 = w2.shape[1]

    if num_tiles is None:
        # One whole-batch tile for typical batches (single grid step; right for
        # v5e/v6e and fine on v7x); two fat tiles only for big batches so
        # v7x's two TensorCores each take one.
        num_tiles = 1 if B <= 512 else 2

    block_b = _round_up(pl.cdiv(B, num_tiles), 8)
    B_pad = num_tiles * block_b
    if B_pad != B:
        # Rare ragged-batch path only; the common case streams x unmodified.
        xp = jnp.zeros((B_pad, S), x.dtype).at[:B].set(x)
    else:
        xp = x

    flops = 2 * B_pad * (S * H1 + H1 * H2 + H2 * A_PAD)
    bytes_accessed = (xp.size * 4 + w1.size * 4 + w2.size * 2 + w3.size * 4
                      + b1.size * 4 + b2.size * 4 + b3.size * 4
                      + B_pad * A_PAD * 4)

    out = pl.pallas_call(
        dqn_kernel,
        out_shape=jax.ShapeDtypeStruct((B_pad, A_PAD), jnp.float32),
        grid_spec=pl.GridSpec(
            grid=(num_tiles,),
            in_specs=[
                pl.BlockSpec((block_b, S), lambda i: (i, 0)),   # x: streamed, f32
                pl.BlockSpec((S, H1), lambda i: (0, 0)),        # w1: resident
                pl.BlockSpec((1, H1), lambda i: (0, 0)),        # b1: resident
                pl.BlockSpec((H1, H2), lambda i: (0, 0)),       # w2: resident (bf16)
                pl.BlockSpec((1, H2), lambda i: (0, 0)),        # b2: resident
                pl.BlockSpec((H2, A_PAD), lambda i: (0, 0)),    # w3: resident (f32)
                pl.BlockSpec((1, A_PAD), lambda i: (0, 0)),     # b3: resident
            ],
            out_specs=pl.BlockSpec((block_b, A_PAD), lambda i: (i, 0)),
        ),
        compiler_params=pltpu.CompilerParams(
            dimension_semantics=("parallel",)),  # one tile per TC when num_tiles>1
        cost_estimate=pl.CostEstimate(
            flops=flops, transcendentals=0, bytes_accessed=bytes_accessed),
    )(xp, w1, b1, w2, b2, w3, b3)

    if not slice_output:
        return out[:B]          # padded columns are exact zeros
    return out[:B, :action_dim]


def reference_forward(x, params):
    """Pure-JAX f32 reference of the PyTorch forward (semantics check)."""
    w1, b1, w2, b2, w3, b3 = params
    h = jnp.maximum(x @ w1 + b1, 0.0)
    h = jnp.maximum(h @ w2 + b2, 0.0)
    return h @ w3 + b3


if __name__ == "__main__":
    batch = 64   # small replay-minibatch; multiple of 8 -> no batch padding

    key = jax.random.PRNGKey(0)
    kx, kp = jax.random.split(key)
    x = jax.random.normal(kx, (batch, STATE_DIM), dtype=jnp.float32)
    params = init_params(kp, STATE_DIM, HIDDEN1, HIDDEN2, ACTION_DIM)
    kernel_params = prepare_params(params)

    q_values = dqn_forward(x, kernel_params)
    q_values = jax.block_until_ready(q_values)

    # Sanity check against the f32 reference (only fc2 runs in bf16).
    ref = reference_forward(x, params)
    assert q_values.shape == (batch, ACTION_DIM)
    max_err = float(jnp.max(jnp.abs(q_values - ref)))
    assert jnp.allclose(q_values, ref, atol=3e-2, rtol=3e-2), max_err

    print("KERNEL_OK")
</pallas_src>

<mosaic_0001>
module attributes {stable_mosaic.version = 11 : i64} {
  func.func @dqn_kernel(%arg0: i32, %arg1: memref<64x5xf32, #tpu.memory_space<vmem>>, %arg2: memref<5x128xf32, #tpu.memory_space<vmem>>, %arg3: memref<1x128xf32, #tpu.memory_space<vmem>>, %arg4: memref<128x128xbf16, #tpu.memory_space<vmem>>, %arg5: memref<1x128xf32, #tpu.memory_space<vmem>>, %arg6: memref<128x128xf32, #tpu.memory_space<vmem>>, %arg7: memref<1x128xf32, #tpu.memory_space<vmem>>, %arg8: memref<64x128xf32, #tpu.memory_space<vmem>>) attributes {dimension_semantics = [#tpu.dimension_semantics<parallel>], iteration_bounds = array<i64: 1>, scalar_prefetch = 0 : i64, scratch_operands = 0 : i64, tpu.core_type = #tpu.core_type<tc>, window_params = [{transform_indices = @transform_0, window_bounds = array<i64: 64, 5>}, {pipeline_mode = #tpu.pipeline_mode<synchronous>, transform_indices = @transform_1, window_bounds = array<i64: 5, 128>}, {pipeline_mode = #tpu.pipeline_mode<synchronous>, transform_indices = @transform_2, window_bounds = array<i64: 1, 128>}, {pipeline_mode = #tpu.pipeline_mode<synchronous>, transform_indices = @transform_3, window_bounds = array<i64: 128, 128>}, {pipeline_mode = #tpu.pipeline_mode<synchronous>, transform_indices = @transform_4, window_bounds = array<i64: 1, 128>}, {pipeline_mode = #tpu.pipeline_mode<synchronous>, transform_indices = @transform_5, window_bounds = array<i64: 128, 128>}, {pipeline_mode = #tpu.pipeline_mode<synchronous>, transform_indices = @transform_6, window_bounds = array<i64: 1, 128>}, {transform_indices = @transform_7, window_bounds = array<i64: 64, 128>}]} {
    %c0 = arith.constant 0 : index
    %c0_0 = arith.constant 0 : index
    %0 = vector.load %arg1[%c0, %c0_0] : memref<64x5xf32, #tpu.memory_space<vmem>>, vector<64x5xf32>
    %c0_1 = arith.constant 0 : index
    %c0_2 = arith.constant 0 : index
    %1 = vector.load %arg2[%c0_1, %c0_2] : memref<5x128xf32, #tpu.memory_space<vmem>>, vector<5x128xf32>
    %cst = arith.constant dense<0.000000e+00> : vector<64x128xf32>
    %2 = tpu.matmul %0, %1, %cst {dimension_numbers = #tpu.dot_dimension_numbers<[1], [0], [0], [1], [0, 0, 1, 1], [], []>} : vector<64x5xf32>, vector<5x128xf32>, vector<64x128xf32> -> vector<64x128xf32>
    %c0_3 = arith.constant 0 : index
    %c0_4 = arith.constant 0 : index
    %3 = vector.load %arg3[%c0_3, %c0_4] : memref<1x128xf32, #tpu.memory_space<vmem>>, vector<1x128xf32>
    %4 = vector.broadcast %3 : vector<1x128xf32> to vector<64x128xf32>
    %5 = arith.addf %2, %4 : vector<64x128xf32>
    %cst_5 = arith.constant 0.000000e+00 : f32
    %6 = vector.broadcast %cst_5 : f32 to vector<64x128xf32>
    %7 = arith.maximumf %5, %6 : vector<64x128xf32>
    %8 = arith.truncf %7 : vector<64x128xf32> to vector<64x128xbf16>
    %c0_6 = arith.constant 0 : index
    %c0_7 = arith.constant 0 : index
    %9 = vector.load %arg4[%c0_6, %c0_7] : memref<128x128xbf16, #tpu.memory_space<vmem>>, vector<128x128xbf16>
    %cst_8 = arith.constant dense<0.000000e+00> : vector<64x128xf32>
    %10 = tpu.matmul %8, %9, %cst_8 {dimension_numbers = #tpu.dot_dimension_numbers<[1], [0], [0], [1], [0, 0, 1, 1], [], []>} : vector<64x128xbf16>, vector<128x128xbf16>, vector<64x128xf32> -> vector<64x128xf32>
    %c0_9 = arith.constant 0 : index
    %c0_10 = arith.constant 0 : index
    %11 = vector.load %arg5[%c0_9, %c0_10] : memref<1x128xf32, #tpu.memory_space<vmem>>, vector<1x128xf32>
    %12 = vector.broadcast %11 : vector<1x128xf32> to vector<64x128xf32>
    %13 = arith.addf %10, %12 : vector<64x128xf32>
    %cst_11 = arith.constant 0.000000e+00 : f32
    %14 = vector.broadcast %cst_11 : f32 to vector<64x128xf32>
    %15 = arith.maximumf %13, %14 : vector<64x128xf32>
    %c0_12 = arith.constant 0 : index
    %c0_13 = arith.constant 0 : index
    %16 = vector.load %arg6[%c0_12, %c0_13] : memref<128x128xf32, #tpu.memory_space<vmem>>, vector<128x128xf32>
    %cst_14 = arith.constant dense<0.000000e+00> : vector<64x128xf32>
    %17 = tpu.matmul %15, %16, %cst_14 {dimension_numbers = #tpu.dot_dimension_numbers<[1], [0], [0], [1], [0, 0, 1, 1], [], []>} : vector<64x128xf32>, vector<128x128xf32>, vector<64x128xf32> -> vector<64x128xf32>
    %c0_15 = arith.constant 0 : index
    %c0_16 = arith.constant 0 : index
    %18 = vector.load %arg7[%c0_15, %c0_16] : memref<1x128xf32, #tpu.memory_space<vmem>>, vector<1x128xf32>
    %19 = vector.broadcast %18 : vector<1x128xf32> to vector<64x128xf32>
    %20 = arith.addf %17, %19 : vector<64x128xf32>
    %c0_17 = arith.constant 0 : index
    %c0_18 = arith.constant 0 : index
    %21 = vector.load %arg8[%c0_17, %c0_18] : memref<64x128xf32, #tpu.memory_space<vmem>>, vector<64x128xf32>
    tpu.vector_store %arg8[%c0_17, %c0_18], %20 {strides = array<i32>} : memref<64x128xf32, #tpu.memory_space<vmem>>, vector<64x128xf32>,
    return
  }
  func.func @transform_0(%arg0: i32) -> (i32, i32) {
    %c0_i32 = arith.constant 0 : i32
    %c0_i32_0 = arith.constant 0 : i32
    return %arg0, %c0_i32 : i32, i32
  }
  func.func @transform_1(%arg0: i32) -> (i32, i32) {
    %c0_i32 = arith.constant 0 : i32
    %c0_i32_0 = arith.constant 0 : i32
    %c0_i32_1 = arith.constant 0 : i32
    return %c0_i32, %c0_i32_0 : i32, i32
  }
  func.func @transform_2(%arg0: i32) -> (i32, i32) {
    %c0_i32 = arith.constant 0 : i32
    %c0_i32_0 = arith.constant 0 : i32
    %c0_i32_1 = arith.constant 0 : i32
    return %c0_i32, %c0_i32_0 : i32, i32
  }
  func.func @transform_3(%arg0: i32) -> (i32, i32) {
    %c0_i32 = arith.constant 0 : i32
    %c0_i32_0 = arith.constant 0 : i32
    %c0_i32_1 = arith.constant 0 : i32
    return %c0_i32, %c0_i32_0 : i32, i32
  }
  func.func @transform_4(%arg0: i32) -> (i32, i32) {
    %c0_i32 = arith.constant 0 : i32
    %c0_i32_0 = arith.constant 0 : i32
    %c0_i32_1 = arith.constant 0 : i32
    return %c0_i32, %c0_i32_0 : i32, i32
  }
  func.func @transform_5(%arg0: i32) -> (i32, i32) {
    %c0_i32 = arith.constant 0 : i32
    %c0_i32_0 = arith.constant 0 : i32
    %c0_i32_1 = arith.constant 0 : i32
    return %c0_i32, %c0_i32_0 : i32, i32
  }
  func.func @transform_6(%arg0: i32) -> (i32, i32) {
    %c0_i32 = arith.constant 0 : i32
    %c0_i32_0 = arith.constant 0 : i32
    %c0_i32_1 = arith.constant 0 : i32
    return %c0_i32, %c0_i32_0 : i32, i32
  }
  func.func @transform_7(%arg0: i32) -> (i32, i32) {
    %c0_i32 = arith.constant 0 : i32
    %c0_i32_0 = arith.constant 0 : i32
    return %arg0, %c0_i32 : i32, i32
  }
}

</mosaic_0001>

<llo_original>
// kernel: tpu_custom_call.1
$region0: #{tpu_custom_call.1}
  #allocation0 [shape = 'u32[]', space=smem, size = 0x4, offset = 0x4, fixed_abs, tag = 'smem constant byte address 0x4 - core index']
  #allocation1 [shape = 'u32[144,128]{1,0:T(1,128)}', space=vmem, size = 0x12000, scoped, tag = 'internal scratch']
  %s0 = inlined_call_operand.vmem [shape: f32[64,5], index: 0, kind: input, shape index: {}]
  %s1 = inlined_call_operand.vmem [shape: f32[5,128], index: 1, kind: input, shape index: {}]
  %s2 = inlined_call_operand.vmem [shape: f32[1,128], index: 2, kind: input, shape index: {}]
  %s3 = inlined_call_operand.vmem [shape: bf16[128,128], index: 3, kind: input, shape index: {}]
  %s4 = inlined_call_operand.vmem [shape: f32[1,128], index: 4, kind: input, shape index: {}]
  %s5 = inlined_call_operand.hbm [shape: f32[128,128], index: 5, kind: input, shape index: {}]
  %s6 = inlined_call_operand.vmem [shape: f32[1,128], index: 6, kind: input, shape index: {}]
  %s7 = inlined_call_operand.hbm [shape: f32[64,128], index: 7, kind: output, shape index: {}]
  %s8 = sld [smem:[#allocation0]]
  $region42: #{tpu_custom_call.1} parent=0
    _
  %s10 = ssub.s32 1, %s8
  %s11 = scalar_select 0, %s10, %s8
  $region1: #{tpu_custom_call.1} parent=0
    #allocation2 [shape = 'u8[65536]{0}', space=vmem, size = 0x10000, scoped, tag = 'input window, operand 5, single buffered']
    #allocation3 [shape = 's32[1]{0}', space=sflag, size = 0x4, scoped, tag = 'scoped memory for tpu_custom_call.1']
    #allocation4 [shape = 's32[1]{0}', space=sflag, size = 0x4, scoped, tag = 'scoped memory for tpu_custom_call.1']
    #allocation5 [shape = 'u8[32768]{0}', space=vmem, size = 0x8000, scoped, tag = 'output window, operand 0, single buffered']
    %12 = vsyncpa [#allocation3], 0
    %13 = vsyncpa [#allocation4], 0
    // Predicated region
    $region2: #{tpu_custom_call.1} parent=1 // pred_check
      _
    $region3: #{tpu_custom_call.1} parent=1 // pred_check_branch
      %15 = sbr.rel (0) target = $region5
    $region4: #{tpu_custom_call.1} parent=1 // pred_region
      _
    $region5: #{tpu_custom_call.1} parent=1 // pred_fallthru
      _
    // Predicated region
    $region6: #{tpu_custom_call.1} parent=1 // pred_check
      _
    $region7: #{tpu_custom_call.1} parent=1 // pred_check_branch
      %17 = sbr.rel (0) target = $region9
    $region8: #{tpu_custom_call.1} parent=1 // pred_region
      _
    $region9: #{tpu_custom_call.1} parent=1 // pred_fallthru
      _
    // Predicated region
    $region10: #{tpu_custom_call.1} parent=1 // pred_check
      _
    $region11: #{tpu_custom_call.1} parent=1 // pred_check_branch
      %19 = sbr.rel (0) target = $region13
    $region12: #{tpu_custom_call.1} parent=1 // pred_region
      _
    $region13: #{tpu_custom_call.1} parent=1 // pred_fallthru
      _
    // Predicated region
    $region14: #{tpu_custom_call.1} parent=1 // pred_check
      _
    $region15: #{tpu_custom_call.1} parent=1 // pred_check_branch
      %21 = sbr.rel (0) target = $region17
    $region16: #{tpu_custom_call.1} parent=1 // pred_region
      _
    $region17: #{tpu_custom_call.1} parent=1 // pred_fallthru
      _
    // Predicated region
    $region18: #{tpu_custom_call.1} parent=1 // pred_check
      _
    $region19: #{tpu_custom_call.1} parent=1 // pred_check_branch
      %23 = sbr.rel (0) target = $region21
    $region20: #{tpu_custom_call.1} parent=1 // pred_region
      _
    $region21: #{tpu_custom_call.1} parent=1 // pred_fallthru
      _
    // Predicated region
    $region22: #{tpu_custom_call.1} parent=1 // pred_check
      _
    $region23: #{tpu_custom_call.1} parent=1 // pred_check_branch
      %25 = sbr.rel (0) target = $region25
    $region24: #{tpu_custom_call.1} parent=1 // pred_region
      %s27 = ssub.s32 2048, 2048
      %28 = vsyncadd [#allocation3], %s27
      %s29 = sshll.u32 [#allocation2], 4
      %s30 = int_to_ptr.vmem [resolvable:$true] %s29
      %35 = dma.hbm_to_vmem [thread:$0]  %s5, 2048, %s30, [#allocation3], 128, 128, 8
    $region25: #{tpu_custom_call.1} parent=1 // pred_fallthru
      _
    // Predicated region
    $region26: #{tpu_custom_call.1} parent=1 // pred_check
      _
    $region27: #{tpu_custom_call.1} parent=1 // pred_check_branch
      %37 = sbr.rel (0) target = $region29
    $region28: #{tpu_custom_call.1} parent=1 // pred_region
      _
    $region29: #{tpu_custom_call.1} parent=1 // pred_fallthru
      _
    // Predicated region
    $region30: #{tpu_custom_call.1} parent=1 // pred_check
      _
    $region31: #{tpu_custom_call.1} parent=1 // pred_check_branch
      %39 = sbr.rel (0) target = $region33
    $region32: #{tpu_custom_call.1} parent=1 // pred_region
      %40 = dma.done [#allocation3], 2048
    $region33: #{tpu_custom_call.1} parent=1 // pred_fallthru
      _
    %v42 = vld [vmem:[%s0] sm:$0xff]
    %v43 = vld [vmem:[%s0 + $0x8] sm:$0xff]
    %v44 = vld [vmem:[%s0 + $0x10] sm:$0xff]
    %v45 = vld [vmem:[%s0 + $0x18] sm:$0xff]
    %v46 = vld [vmem:[%s0 + $0x20] sm:$0xff]
    %v47 = vld [vmem:[%s0 + $0x28] sm:$0xff]
    %v48 = vld [vmem:[%s0 + $0x30] sm:$0xff]
    %v49 = vld [vmem:[%s0 + $0x38] sm:$0xff]
    %v50 = vld [vmem:[%s1] sm:$0x1f]
    %v51 = vld [vmem:[%s2] sm:$0x1]
    %v53 = vlaneseq
    %v54 = vshrl.u32 %v53, 7
    %v55 = vsub.s32 0, %v54
    %v56 = vrot.slane %v51, %v55
    %vm58 = vcmask 39936
    %v60 = vsel %vm58, %v42, 0
    %v63 = vsel %vm58, %v43, 0
    %v66 = vsel %vm58, %v44, 0
    %v69 = vsel %vm58, %v45, 0
    %v72 = vsel %vm58, %v46, 0
    %v75 = vsel %vm58, %v47, 0
    %v78 = vsel %vm58, %v48, 0
    %v81 = vsel %vm58, %v49, 0
    %vm83 = vcmask 1044480
    %v85 = vsel %vm83, %v50, 0
    %87 = vmatprep.subr.mxu0 0.0
    %88 = vmatpush1.msra.mxu0 0.0
    %89 = vmatprep.subr.mxu0 0.0
    %90 = vmatpush1.msra.mxu0 0.0
    %91 = vmatprep.subr.mxu0 0.0
    %92 = vmatpush1.msra.mxu0 0.0
    %93 = vmatprep.subr.mxu0 0.0
    %94 = vmatpush1.msra.mxu0 0.0
    %95 = vmatprep.subr.mxu0 0.0
    %96 = vmatpush1.msra.mxu0 0.0
    %97 = vmatprep.subr.mxu0 0.0
    %98 = vmatpush1.msra.mxu0 0.0
    %99 = vmatprep.subr.mxu0 0.0
    %100 = vmatpush1.msra.mxu0 0.0
    %101 = vmatprep.subr.mxu0 0.0
    %102 = vmatpush1.msra.mxu0 0.0
    %103 = vmatprep.subr.mxu0 0.0
    %104 = vmatpush1.msra.mxu0 0.0
    %105 = vmatprep.subr.mxu0 0.0
    %106 = vmatpush1.msra.mxu0 0.0
    %107 = vmatprep.subr.mxu0 0.0
    %108 = vmatpush1.msra.mxu0 0.0
    %109 = vmatprep.subr.mxu0 0.0
    %110 = vmatpush1.msra.mxu0 0.0
    %111 = vmatprep.subr.mxu0 0.0
    %112 = vmatpush1.msra.mxu0 0.0
    %113 = vmatprep.subr.mxu0 0.0
    %114 = vmatpush1.msra.mxu0 0.0
    %115 = vmatprep.subr.mxu0 0.0
    %116 = vmatpush1.msra.mxu0 0.0
    %117 = vmatprep.subr.mxu0 0.0
    %118 = vmatpush1.msra.mxu0 %v85
    %119 = vmatprep.subr.mxu0 0.0
    %120 = vmatpush2.msra.mxu0 0.0
    %121 = vmatprep.subr.mxu0 0.0
    %122 = vmatpush2.msra.mxu0 0.0
    %123 = vmatprep.subr.mxu0 0.0
    %124 = vmatpush2.msra.mxu0 0.0
    %125 = vmatprep.subr.mxu0 0.0
    %126 = vmatpush2.msra.mxu0 0.0
    %127 = vmatprep.subr.mxu0 0.0
    %128 = vmatpush2.msra.mxu0 0.0
    %129 = vmatprep.subr.mxu0 0.0
    %130 = vmatpush2.msra.mxu0 0.0
    %131 = vmatprep.subr.mxu0 0.0
    %132 = vmatpush2.msra.mxu0 0.0
    %133 = vmatprep.subr.mxu0 0.0
    %134 = vmatpush2.msra.mxu0 0.0
    %135 = vmatprep.subr.mxu0 0.0
    %136 = vmatpush2.msra.mxu0 0.0
    %137 = vmatprep.subr.mxu0 0.0
    %138 = vmatpush2.msra.mxu0 0.0
    %139 = vmatprep.subr.mxu0 0.0
    %140 = vmatpush2.msra.mxu0 0.0
    %141 = vmatprep.subr.mxu0 0.0
    %142 = vmatpush2.msra.mxu0 0.0
    %143 = vmatprep.subr.mxu0 0.0
    %144 = vmatpush2.msra.mxu0 0.0
    %145 = vmatprep.subr.mxu0 0.0
    %146 = vmatpush2.msra.mxu0 0.0
    %147 = vmatprep.subr.mxu0 0.0
    %148 = vmatpush2.msra.mxu0 0.0
    %149 = vmatprep.subr.mxu0 0.0
    %150 = vmatpush2.msra.mxu0 0.0
    %151 = vmatprep.mubr.f32.mxu0 0.0
    %152 = vmatmul.mubr.f32.gmra.mxu0 %v60
    %v153 = vpop.f32.mrf.mxu0
    %v154 = vadd.f32 %v56, %v153
    %v155 = vpop.f32.mrf.mxu0
    %156 = vmatprep.mubr.f32.mxu0 0.0
    %157 = vmatmul.mubr.f32.gmra.mxu0 %v63
    %v158 = vpop.f32.mrf.mxu0
    %v159 = vadd.f32 %v56, %v158
    %v160 = vpop.f32.mrf.mxu0
    %161 = vmatprep.mubr.f32.mxu0 0.0
    %162 = vmatmul.mubr.f32.gmra.mxu0 %v66
    %v163 = vpop.f32.mrf.mxu0
    %v164 = vadd.f32 %v56, %v163
    %v165 = vpop.f32.mrf.mxu0
    %166 = vmatprep.mubr.f32.mxu0 0.0
    %167 = vmatmul.mubr.f32.gmra.mxu0 %v69
    %v168 = vpop.f32.mrf.mxu0
    %v169 = vadd.f32 %v56, %v168
    %v170 = vpop.f32.mrf.mxu0
    %171 = vmatprep.mubr.f32.mxu0 0.0
    %172 = vmatmul.mubr.f32.gmra.mxu0 %v72
    %v173 = vpop.f32.mrf.mxu0
    %v174 = vadd.f32 %v56, %v173
    %v175 = vpop.f32.mrf.mxu0
    %176 = vmatprep.mubr.f32.mxu0 0.0
    %177 = vmatmul.mubr.f32.gmra.mxu0 %v75
    %v178 = vpop.f32.mrf.mxu0
    %v179 = vadd.f32 %v56, %v178
    %v180 = vpop.f32.mrf.mxu0
    %181 = vmatprep.mubr.f32.mxu0 0.0
    %182 = vmatmul.mubr.f32.gmra.mxu0 %v78
    %v183 = vpop.f32.mrf.mxu0
    %v184 = vadd.f32 %v56, %v183
    %v185 = vpop.f32.mrf.mxu0
    %186 = vmatprep.mubr.f32.mxu0 0.0
    %187 = vmatmul.mubr.f32.gmra.mxu0 %v81
    %v188 = vpop.f32.mrf.mxu0
    %v189 = vadd.f32 %v56, %v188
    %v190 = vpop.f32.mrf.mxu0
    %191 = vdwg.mxu0
    %v192 = vmax.f32 %v154, 0.0
    %v193 = vmax.f32 %v159, 0.0
    %v194 = vmax.f32 %v164, 0.0
    %v195 = vmax.f32 %v169, 0.0
    %v196 = vmax.f32 %v174, 0.0
    %v197 = vmax.f32 %v179, 0.0
    %v198 = vmax.f32 %v184, 0.0
    %v199 = vmax.f32 %v189, 0.0
    %v200 = vpack.c.bf16 %v193, %v192
    %v201 = vpack.c.bf16 %v195, %v194
    %v202 = vpack.c.bf16 %v197, %v196
    %v203 = vpack.c.bf16 %v199, %v198
    %v204 = vld [vmem:[%s3] sm:$0xf]
    %v205 = vld [vmem:[%s3 + $0x4] sm:$0xf]
    %v206 = vld [vmem:[%s3 + $0x8] sm:$0xf]
    %v207 = vld [vmem:[%s3 + $0xc] sm:$0xf]
    %v208 = vld [vmem:[%s3 + $0x10] sm:$0xf]
    %v209 = vld [vmem:[%s3 + $0x14] sm:$0xf]
    %v210 = vld [vmem:[%s3 + $0x18] sm:$0xf]
    %v211 = vld [vmem:[%s3 + $0x1c] sm:$0xf]
    %v212 = vld [vmem:[%s3 + $0x20] sm:$0xf]
    %v213 = vld [vmem:[%s3 + $0x24] sm:$0xf]
    %v214 = vld [vmem:[%s3 + $0x28] sm:$0xf]
    %v215 = vld [vmem:[%s3 + $0x2c] sm:$0xf]
    %v216 = vld [vmem:[%s3 + $0x30] sm:$0xf]
    %v217 = vld [vmem:[%s3 + $0x34] sm:$0xf]
    %v218 = vld [vmem:[%s3 + $0x38] sm:$0xf]
    %v219 = vld [vmem:[%s3 + $0x3c] sm:$0xf]
    %v220 = vld [vmem:[%s4] sm:$0x1]
    %v222 = vlaneseq
    %v223 = vshrl.u32 %v222, 7
    %v224 = vsub.s32 0, %v223
    %v225 = vrot.slane %v220, %v224
    %v243 = vunpack.c.l.b16 %v204
    %v244 = vunpack.c.l.b16 %v205
    %v245 = vunpack.c.l.b16 %v206
    %v246 = vunpack.c.l.b16 %v207
    %v247 = vunpack.c.l.b16 %v208
    %v248 = vunpack.c.l.b16 %v209
    %v249 = vunpack.c.l.b16 %v210
    %v250 = vunpack.c.l.b16 %v211
    %v251 = vunpack.c.l.b16 %v212
    %v252 = vunpack.c.l.b16 %v213
    %v253 = vunpack.c.l.b16 %v214
    %v254 = vunpack.c.l.b16 %v215
    %v255 = vunpack.c.l.b16 %v216
    %v256 = vunpack.c.l.b16 %v217
    %v257 = vunpack.c.l.b16 %v218
    %v258 = vunpack.c.l.b16 %v219
    %v259 = vpack.c.b16 %v244, %v243
    %v260 = vpack.c.b16 %v246, %v245
    %v261 = vpack.c.b16 %v248, %v247
    %v262 = vpack.c.b16 %v250, %v249
    %v263 = vpack.c.b16 %v252, %v251
    %v264 = vpack.c.b16 %v254, %v253
    %v265 = vpack.c.b16 %v256, %v255
    %v266 = vpack.c.b16 %v258, %v257
    %275 = vmatprep.subr.bf16.mxu0 0
    %276 = vmatpush1.bf16.msra.mxu0 %v266
    %277 = vmatprep.subr.bf16.mxu0 0
    %278 = vmatpush1.bf16.msra.mxu0 %v265
    %279 = vmatprep.subr.bf16.mxu0 0
    %280 = vmatpush1.bf16.msra.mxu0 %v264
    %281 = vmatprep.subr.bf16.mxu0 0
    %282 = vmatpush1.bf16.msra.mxu0 %v263
    %283 = vmatprep.subr.bf16.mxu0 0
    %284 = vmatpush1.bf16.msra.mxu0 %v262
    %285 = vmatprep.subr.bf16.mxu0 0
    %286 = vmatpush1.bf16.msra.mxu0 %v261
    %287 = vmatprep.subr.bf16.mxu0 0
    %288 = vmatpush1.bf16.msra.mxu0 %v260
    %289 = vmatprep.subr.bf16.mxu0 0
    %290 = vmatpush1.bf16.msra.mxu0 %v259
    %291 = vmatprep.subr.bf16.mxu0 0
    %292 = vmatpush2.bf16.msra.mxu0 0
    %293 = vmatprep.subr.bf16.mxu0 0
    %294 = vmatpush2.bf16.msra.mxu0 0
    %295 = vmatprep.subr.bf16.mxu0 0
    %296 = vmatpush2.bf16.msra.mxu0 0
    %297 = vmatprep.subr.bf16.mxu0 0
    %298 = vmatpush2.bf16.msra.mxu0 0
    %299 = vmatprep.subr.bf16.mxu0 0
    %300 = vmatpush2.bf16.msra.mxu0 0
    %301 = vmatprep.subr.bf16.mxu0 0
    %302 = vmatpush2.bf16.msra.mxu0 0
    %303 = vmatprep.subr.bf16.mxu0 0
    %304 = vmatpush2.bf16.msra.mxu0 0
    %305 = vmatprep.subr.bf16.mxu0 0
    %306 = vmatpush2.bf16.msra.mxu0 0
    %307 = vmatprep.mubr.bf16.mxu0 0
    %308 = vmatmul.mubr.bf16.gmra.mxu0 %v200
    %v309 = vpop.f32.mrf.mxu0
    %v310 = vadd.f32 %v225, %v309
    %v311 = vpop.f32.mrf.mxu0
    %v312 = vpop.f32.mrf.mxu0
    %v313 = vadd.f32 %v225, %v312
    %v314 = vpop.f32.mrf.mxu0
    %315 = vmatprep.mubr.bf16.mxu0 0
    %316 = vmatmul.mubr.bf16.gmra.mxu0 %v201
    %v317 = vpop.f32.mrf.mxu0
    %v318 = vadd.f32 %v225, %v317
    %v319 = vpop.f32.mrf.mxu0
    %v320 = vpop.f32.mrf.mxu0
    %v321 = vadd.f32 %v225, %v320
    %v322 = vpop.f32.mrf.mxu0
    %323 = vmatprep.mubr.bf16.mxu0 0
    %324 = vmatmul.mubr.bf16.gmra.mxu0 %v202
    %v325 = vpop.f32.mrf.mxu0
    %v326 = vadd.f32 %v225, %v325
    %v327 = vpop.f32.mrf.mxu0
    %v328 = vpop.f32.mrf.mxu0
    %v329 = vadd.f32 %v225, %v328
    %v330 = vpop.f32.mrf.mxu0
    %331 = vmatprep.mubr.bf16.mxu0 0
    %332 = vmatmul.mubr.bf16.gmra.mxu0 %v203
    %v333 = vpop.f32.mrf.mxu0
    %v334 = vadd.f32 %v225, %v333
    %v335 = vpop.f32.mrf.mxu0
    %v336 = vpop.f32.mrf.mxu0
    %v337 = vadd.f32 %v225, %v336
    %v338 = vpop.f32.mrf.mxu0
    %339 = vdwg.mxu0
    %v340 = vmax.f32 %v310, 0.0
    %v341 = vmax.f32 %v313, 0.0
    %v342 = vmax.f32 %v318, 0.0
    %v343 = vmax.f32 %v321, 0.0
    %v344 = vmax.f32 %v326, 0.0
    %v345 = vmax.f32 %v329, 0.0
    %v346 = vmax.f32 %v334, 0.0
    %v347 = vmax.f32 %v337, 0.0
    %v348 = vld [vmem:[#allocation2] sm:$0xff]
    %v349 = vld [vmem:[#allocation2 + $0x8] sm:$0xff]
    %v350 = vld [vmem:[#allocation2 + $0x10] sm:$0xff]
    %v351 = vld [vmem:[#allocation2 + $0x18] sm:$0xff]
    %v352 = vld [vmem:[#allocation2 + $0x20] sm:$0xff]
    %v353 = vld [vmem:[#allocation2 + $0x28] sm:$0xff]
    %v354 = vld [vmem:[#allocation2 + $0x30] sm:$0xff]
    %v355 = vld [vmem:[#allocation2 + $0x38] sm:$0xff]
    %v356 = vld [vmem:[#allocation2 + $0x40] sm:$0xff]
    %v357 = vld [vmem:[#allocation2 + $0x48] sm:$0xff]
    %v358 = vld [vmem:[#allocation2 + $0x50] sm:$0xff]
    %v359 = vld [vmem:[#allocation2 + $0x58] sm:$0xff]
    %v360 = vld [vmem:[#allocation2 + $0x60] sm:$0xff]
    %v361 = vld [vmem:[#allocation2 + $0x68] sm:$0xff]
    %v362 = vld [vmem:[#allocation2 + $0x70] sm:$0xff]
    %v363 = vld [vmem:[#allocation2 + $0x78] sm:$0xff]
    %v364 = vld [vmem:[%s6] sm:$0x1]
    %v366 = vlaneseq
    %v367 = vshrl.u32 %v366, 7
    %v368 = vsub.s32 0, %v367
    %v369 = vrot.slane %v364, %v368
    %371 = vmatprep.subr.mxu0 0.0
    %372 = vmatpush1.msra.mxu0 %v363
    %373 = vmatprep.subr.mxu0 0.0
    %374 = vmatpush1.msra.mxu0 %v362
    %375 = vmatprep.subr.mxu0 0.0
    %376 = vmatpush1.msra.mxu0 %v361
    %377 = vmatprep.subr.mxu0 0.0
    %378 = vmatpush1.msra.mxu0 %v360
    %379 = vmatprep.subr.mxu0 0.0
    %380 = vmatpush1.msra.mxu0 %v359
    %381 = vmatprep.subr.mxu0 0.0
    %382 = vmatpush1.msra.mxu0 %v358
    %383 = vmatprep.subr.mxu0 0.0
    %384 = vmatpush1.msra.mxu0 %v357
    %385 = vmatprep.subr.mxu0 0.0
    %386 = vmatpush1.msra.mxu0 %v356
    %387 = vmatprep.subr.mxu0 0.0
    %388 = vmatpush1.msra.mxu0 %v355
    %389 = vmatprep.subr.mxu0 0.0
    %390 = vmatpush1.msra.mxu0 %v354
    %391 = vmatprep.subr.mxu0 0.0
    %392 = vmatpush1.msra.mxu0 %v353
    %393 = vmatprep.subr.mxu0 0.0
    %394 = vmatpush1.msra.mxu0 %v352
    %395 = vmatprep.subr.mxu0 0.0
    %396 = vmatpush1.msra.mxu0 %v351
    %397 = vmatprep.subr.mxu0 0.0
    %398 = vmatpush1.msra.mxu0 %v350
    %399 = vmatprep.subr.mxu0 0.0
    %400 = vmatpush1.msra.mxu0 %v349
    %401 = vmatprep.subr.mxu0 0.0
    %402 = vmatpush1.msra.mxu0 %v348
    %403 = vmatprep.subr.mxu0 0.0
    %404 = vmatpush2.msra.mxu0 0.0
    %405 = vmatprep.subr.mxu0 0.0
    %406 = vmatpush2.msra.mxu0 0.0
    %407 = vmatprep.subr.mxu0 0.0
    %408 = vmatpush2.msra.mxu0 0.0
    %409 = vmatprep.subr.mxu0 0.0
    %410 = vmatpush2.msra.mxu0 0.0
    %411 = vmatprep.subr.mxu0 0.0
    %412 = vmatpush2.msra.mxu0 0.0
    %413 = vmatprep.subr.mxu0 0.0
    %414 = vmatpush2.msra.mxu0 0.0
    %415 = vmatprep.subr.mxu0 0.0
    %416 = vmatpush2.msra.mxu0 0.0
    %417 = vmatprep.subr.mxu0 0.0
    %418 = vmatpush2.msra.mxu0 0.0
    %419 = vmatprep.subr.mxu0 0.0
    %420 = vmatpush2.msra.mxu0 0.0
    %421 = vmatprep.subr.mxu0 0.0
    %422 = vmatpush2.msra.mxu0 0.0
    %423 = vmatprep.subr.mxu0 0.0
    %424 = vmatpush2.msra.mxu0 0.0
    %425 = vmatprep.subr.mxu0 0.0
    %426 = vmatpush2.msra.mxu0 0.0
    %427 = vmatprep.subr.mxu0 0.0
    %428 = vmatpush2.msra.mxu0 0.0
    %429 = vmatprep.subr.mxu0 0.0
    %430 = vmatpush2.msra.mxu0 0.0
    %431 = vmatprep.subr.mxu0 0.0
    %432 = vmatpush2.msra.mxu0 0.0
    %433 = vmatprep.subr.mxu0 0.0
    %434 = vmatpush2.msra.mxu0 0.0
    %435 = vmatprep.mubr.f32.mxu0 0.0
    %436 = vmatmul.mubr.f32.gmra.mxu0 %v340
    %v437 = vpop.f32.mrf.mxu0
    %v438 = vadd.f32 %v369, %v437
    %v439 = vpop.f32.mrf.mxu0
    %440 = vmatprep.mubr.f32.mxu0 0.0
    %441 = vmatmul.mubr.f32.gmra.mxu0 %v341
    %v442 = vpop.f32.mrf.mxu0
    %v443 = vadd.f32 %v369, %v442
    %v444 = vpop.f32.mrf.mxu0
    %445 = vmatprep.mubr.f32.mxu0 0.0
    %446 = vmatmul.mubr.f32.gmra.mxu0 %v342
    %v447 = vpop.f32.mrf.mxu0
    %v448 = vadd.f32 %v369, %v447
    %v449 = vpop.f32.mrf.mxu0
    %450 = vmatprep.mubr.f32.mxu0 0.0
    %451 = vmatmul.mubr.f32.gmra.mxu0 %v343
    %v452 = vpop.f32.mrf.mxu0
    %v453 = vadd.f32 %v369, %v452
    %v454 = vpop.f32.mrf.mxu0
    %455 = vmatprep.mubr.f32.mxu0 0.0
    %456 = vmatmul.mubr.f32.gmra.mxu0 %v344
    %v457 = vpop.f32.mrf.mxu0
    %v458 = vadd.f32 %v369, %v457
    %v459 = vpop.f32.mrf.mxu0
    %460 = vmatprep.mubr.f32.mxu0 0.0
    %461 = vmatmul.mubr.f32.gmra.mxu0 %v345
    %v462 = vpop.f32.mrf.mxu0
    %v463 = vadd.f32 %v369, %v462
    %v464 = vpop.f32.mrf.mxu0
    %465 = vmatprep.mubr.f32.mxu0 0.0
    %466 = vmatmul.mubr.f32.gmra.mxu0 %v346
    %v467 = vpop.f32.mrf.mxu0
    %v468 = vadd.f32 %v369, %v467
    %v469 = vpop.f32.mrf.mxu0
    %470 = vmatprep.mubr.f32.mxu0 0.0
    %471 = vmatmul.mubr.f32.gmra.mxu0 %v347
    %v472 = vpop.f32.mrf.mxu0
    %v473 = vadd.f32 %v369, %v472
    %v474 = vpop.f32.mrf.mxu0
    %475 = vdwg.mxu0
    %476 = vst [vmem:[#allocation5] sm:$0xff] %v438
    %477 = vst [vmem:[#allocation5 + $0x8] sm:$0xff] %v443
    %478 = vst [vmem:[#allocation5 + $0x10] sm:$0xff] %v448
    %479 = vst [vmem:[#allocation5 + $0x18] sm:$0xff] %v453
    %480 = vst [vmem:[#allocation5 + $0x20] sm:$0xff] %v458
    %481 = vst [vmem:[#allocation5 + $0x28] sm:$0xff] %v463
    %482 = vst [vmem:[#allocation5 + $0x30] sm:$0xff] %v468
    %483 = vst [vmem:[#allocation5 + $0x38] sm:$0xff] %v473
    // Predicated region
    $region34: #{tpu_custom_call.1} parent=1 // pred_check
      _
    $region35: #{tpu_custom_call.1} parent=1 // pred_check_branch
      %485 = sbr.rel (0) target = $region37
    $region36: #{tpu_custom_call.1} parent=1 // pred_region
      %s487 = ssub.s32 1024, 1024
      %488 = vsyncadd [#allocation4], %s487
      %s489 = sshll.u32 [#allocation5], 4
      %s490 = int_to_ptr.vmem [resolvable:$true] %s489
      %495 = dma.vmem_to_hbm [thread:$0]  %s490, 1024, %s7, [#allocation4], 128, 128, 8
    $region37: #{tpu_custom_call.1} parent=1 // pred_fallthru
      _
    // Predicated region
    $region38: #{tpu_custom_call.1} parent=1 // pred_check
      _
    $region39: #{tpu_custom_call.1} parent=1 // pred_check_branch
      %497 = sbr.rel (0) target = $region41
    $region40: #{tpu_custom_call.1} parent=1 // pred_region
      %498 = dma.done [#allocation4], 1024
    $region41: #{tpu_custom_call.1} parent=1 // pred_fallthru
      _
    %499 = vsyncpa [#allocation3], 1
    %500 = vsyncpa [#allocation4], 1

</llo_original>
